<compile_context>
chip_gen: v6e
topology: v6e:2x2x1
jax: 0.10.0
libtpu: 0.0.40
codegen_flags: <defaults>
</compile_context>

<pallas_src>
import jax
import jax.numpy as jnp
from jax.experimental import pallas as pl
from jax.experimental.pallas import tpu as pltpu

# Large negative finite sentinel ("-inf" stand-in, representable in bf16 too).
_NEG_SENTINEL = -3.0e38
# Padded-target fill value: makes norm_p - norm_t hugely negative at padded
# pixels, so they can never win the global (unmasked) max.
_PAD_TARGET = 1.0e18


# --------------------------------------------------------------------------
# Kernels
# --------------------------------------------------------------------------
def _phase1_kernel(pred_ref, target_ref, mask_ref, slab_ref, stats_ref):
    """One (image n, pixel-row tile pj): channel L2 norms, masked |diff| slab,
    per-tile partial (sum1, cnt1, max(norm_p - norm_t))."""
    C = pred_ref.shape[1]

    # Channel reduction as unrolled elementwise VPU adds on pixel-dense
    # (r_tile, 128) slabs: full vreg occupancy, no sublane (XLU) reduce, no
    # MXU layout churn for a 3-4 element reduction.
    ssq_p = None
    ssq_t = None
    for c in range(C):  # C is small & static -> unrolled at trace time
        pc = pred_ref[0, c, :, :].astype(jnp.float32)
        tc = target_ref[0, c, :, :].astype(jnp.float32)
        ssq_p = pc * pc if ssq_p is None else ssq_p + pc * pc
        ssq_t = tc * tc if ssq_t is None else ssq_t + tc * tc
    norm_p = jnp.sqrt(ssq_p)
    norm_t = jnp.sqrt(ssq_t)

    d_signed = norm_p - norm_t            # feeds the global, UNmasked max
    absd = jnp.abs(d_signed)              # == |norm_t - norm_p|
    valid = mask_ref[0, 0, :, :] != 0     # (r_tile, 128) bool

    # Masked |diff| slab for phase 2. Sentinel marks invalid/padded pixels and
    # is guaranteed below any reachable huber_c (huber_c >= -0.2*f32_max/...).
    slab_ref[0, :, :] = jnp.where(valid, absd, _NEG_SENTINEL).astype(slab_ref.dtype)

    # Per-(image, tile) partials, written exactly once per grid step -> no
    # sequential accumulation, so both grid axes can be "parallel" (v7x 2-TC).
    # Padded pixels (if any) have mask==0 and d_signed ~ -2e18, so they affect
    # neither the sums nor the max.
    stats_ref[0, 0, 0] = jnp.sum(jnp.where(valid, absd, 0.0))
    stats_ref[0, 0, 1] = jnp.sum(valid.astype(jnp.float32))
    stats_ref[0, 0, 2] = jnp.max(d_signed)


def _phase2_kernel(hc_ref, slab_ref, stats_ref):
    """One (image n, pixel-row tile pj): partial (sum2, cnt2) gated by huber_c."""
    hc = hc_ref[0]                        # scalar huber_c from SMEM
    a = slab_ref[0, :, :].astype(jnp.float32)   # masked |diff| (sentinel=invalid)
    hmask = a > hc                        # sentinel (-3e38) can never pass
    # Zero the gated-out lanes BEFORE squaring so sentinel^2 never forms inf.
    aw = jnp.where(hmask, a, 0.0)
    stats_ref[0, 0, 0] = jnp.sum(aw * aw)
    stats_ref[0, 0, 1] = jnp.sum(hmask.astype(jnp.float32))


# --------------------------------------------------------------------------
# Tiling helpers
# --------------------------------------------------------------------------
def _largest_aligned_divisor(n, cap):
    """Largest d <= cap with d % 8 == 0 and n % d == 0 (0 if none)."""
    d = (min(cap, n) // 8) * 8
    while d >= 8:
        if n % d == 0:
            return d
        d -= 8
    return 0


def _choose_phase1_tile(rows, cap):
    """Pick (r_tile, rows_pad): r_tile divides rows_pad, rows_pad >= rows, and
    the block is layout-legal (r_tile % 8 == 0 or r_tile == full dim).
    Prefers rows_pad == rows so the wrapper never has to jnp.pad (HBM copy)."""
    cap = max(8, cap)
    if rows <= cap:
        return rows, rows                  # single tile spanning the full dim
    d = _largest_aligned_divisor(rows, cap)
    if d >= 128:                           # good aligned divisor: no padding
        return d, rows
    # Pathological row count: fall back to minimal, aligned row padding.
    n_t = -(-rows // cap)                  # number of tiles
    per = -(-rows // n_t)                  # balanced rows per tile
    r_tile = -(-per // 8) * 8              # sublane-aligned
    return r_tile, n_t * r_tile


def _choose_phase2_tile(rows_pad, r_tile1, cap2):
    """Fold k phase-1 tiles per phase-2 grid step (slab is only ~4 B/pixel,
    so per-step overhead matters more there)."""
    if rows_pad <= cap2:
        return rows_pad
    n1 = rows_pad // r_tile1
    for k in range(n1, 0, -1):
        if n1 % k == 0 and r_tile1 * k <= cap2:
            return r_tile1 * k
    return r_tile1


# --------------------------------------------------------------------------
# Wrapper
# --------------------------------------------------------------------------
def berhu_loss(pred, target, valid_mask, *,
               max_rows_per_tile=2048,
               max_rows_per_tile_phase2=4096,
               vmem_budget_bytes=20 * 1024 * 1024,
               slab_dtype=jnp.float32):
    """pred, target: (N, C, H, W); valid_mask: (N, 1, H, W) bool/int/float.

    slab_dtype=jnp.bfloat16 halves the inter-phase HBM traffic but rounds the
    |diff| values used by the `diff > huber_c` threshold (may flip borderline
    elements vs. the exact float32 / PyTorch result)."""
    assert pred.ndim == target.ndim, "inconsistent dimensions"
    N, C, H, W = pred.shape
    P = H * W
    rows = -(-P // 128)                               # ceil(P / 128)

    # ---- Phase-1 tile: fit a ~20 MiB double-buffered working set (safe on
    # v7x's 64 MiB physical / 32 MiB scoped VMEM) and keep >=4 tiles/image
    # for DMA/compute overlap on larger images.
    in_bytes = jnp.dtype(pred.dtype).itemsize
    slab_bytes = jnp.dtype(slab_dtype).itemsize
    bytes_per_row = 128 * (2 * C * in_bytes + 1 + slab_bytes)  # pred+target+mask+slab
    vmem_cap_rows = vmem_budget_bytes // (2 * bytes_per_row)
    pipeline_cap_rows = max(512, -(-rows // 4))
    cap1 = int(max(8, min(max_rows_per_tile, vmem_cap_rows, pipeline_cap_rows)))
    r_tile1, rows_pad = _choose_phase1_tile(rows, cap1)
    n_tiles1 = rows_pad // r_tile1

    # ---- Phase-2 tile: much larger (slab is only slab_bytes/pixel).
    cap2 = int(max(8, min(max_rows_per_tile_phase2,
                          vmem_budget_bytes // (2 * 128 * slab_bytes),
                          max(2048, -(-rows_pad // 2)))))
    r_tile2 = _choose_phase2_tile(rows_pad, r_tile1, cap2)
    n_tiles2 = rows_pad // r_tile2

    P_pad = rows_pad * 128

    # Mask stays 1 byte/pixel. int8/uint8 pass straight through (no extra XLA
    # op); bool pays one tiny 1B->1B convert; anything else gets a truthiness
    # compare + int8 cast.
    if valid_mask.dtype in (jnp.int8, jnp.uint8):
        mask_r = valid_mask.reshape(N, 1, P)
    elif valid_mask.dtype == jnp.bool_:
        mask_r = valid_mask.reshape(N, 1, P).astype(jnp.int8)
    else:
        mask_r = (valid_mask.reshape(N, 1, P) != 0).astype(jnp.int8)

    pred_r = pred.reshape(N, C, P)
    target_r = target.reshape(N, C, P)
    if P_pad != P:
        # Rare path (H*W not a multiple of 128, or no usable divisor tile).
        # Target pads with a huge value so norm_p - norm_t is hugely negative
        # at padded pixels (never the global max); mask pads to 0 (never
        # counted).  This removes all per-tile index masking inside the kernel.
        padw = ((0, 0), (0, 0), (0, P_pad - P))
        pred_r = jnp.pad(pred_r, padw)
        target_r = jnp.pad(target_r, padw, constant_values=_PAD_TARGET)
        mask_r = jnp.pad(mask_r, padw)
    pred_r = pred_r.reshape(N, C, rows_pad, 128)
    target_r = target_r.reshape(N, C, rows_pad, 128)
    mask_r = mask_r.reshape(N, 1, rows_pad, 128)

    cparams = pltpu.CompilerParams(
        dimension_semantics=("parallel", "parallel"),   # per-step disjoint outputs
        vmem_limit_bytes=32 * 1024 * 1024,
    )

    # ---- Phase 1: stream pred/target/mask once; emit the |diff| slab plus
    # per-(image, tile) partial (sum1, cnt1, max(norm_p - norm_t)).
    slab, stats1 = pl.pallas_call(
        _phase1_kernel,
        out_shape=(
            jax.ShapeDtypeStruct((N, rows_pad, 128), slab_dtype),
            jax.ShapeDtypeStruct((N, n_tiles1, 3), jnp.float32),
        ),
        grid=(N, n_tiles1),
        in_specs=[
            pl.BlockSpec((1, C, r_tile1, 128), lambda n, pj: (n, 0, pj, 0)),
            pl.BlockSpec((1, C, r_tile1, 128), lambda n, pj: (n, 0, pj, 0)),
            pl.BlockSpec((1, 1, r_tile1, 128), lambda n, pj: (n, 0, pj, 0)),
        ],
        out_specs=(
            pl.BlockSpec((1, r_tile1, 128), lambda n, pj: (n, pj, 0)),
            pl.BlockSpec((1, 1, 3), lambda n, pj: (n, pj, 0),
                         memory_space=pltpu.SMEM),
        ),
        compiler_params=cparams,
    )(pred_r, target_r, mask_r)

    # Tiny cross-tile/-image combine in plain JAX.
    sum1 = jnp.sum(stats1[:, :, 0])
    cnt1 = jnp.sum(stats1[:, :, 1])
    huber_c = 0.2 * jnp.max(stats1[:, :, 2])   # global max BEFORE any masking

    # ---- Phase 2: re-read only the slab (4 or 2 B/pixel) with bigger tiles,
    # gated by the global huber_c held in SMEM.
    stats2 = pl.pallas_call(
        _phase2_kernel,
        out_shape=jax.ShapeDtypeStruct((N, n_tiles2, 2), jnp.float32),
        grid=(N, n_tiles2),
        in_specs=[
            pl.BlockSpec(memory_space=pltpu.SMEM),     # huber_c scalar
            pl.BlockSpec((1, r_tile2, 128), lambda n, pj: (n, pj, 0)),
        ],
        out_specs=pl.BlockSpec((1, 1, 2), lambda n, pj: (n, pj, 0),
                               memory_space=pltpu.SMEM),
        compiler_params=cparams,
    )(jnp.reshape(huber_c, (1,)).astype(jnp.float32), slab)

    sum2 = jnp.sum(stats2[:, :, 0])
    cnt2 = jnp.sum(stats2[:, :, 1])

    # mean(cat(diff, diff2)) == (sum1 + sum2) / (cnt1 + cnt2)
    return (sum1 + sum2) / (cnt1 + cnt2)


# --------------------------------------------------------------------------
# Pure-JAX reference (spec)
# --------------------------------------------------------------------------
def _berhu_loss_ref(pred, target, valid_mask):
    norm_p = jnp.sqrt(jnp.sum(pred * pred, axis=1, keepdims=True))
    norm_t = jnp.sqrt(jnp.sum(target * target, axis=1, keepdims=True))
    huber_c = 0.2 * jnp.max(norm_p - norm_t)
    diff = jnp.abs(norm_t - norm_p)
    valid = valid_mask
    sum1 = jnp.sum(jnp.where(valid, diff, 0.0))
    cnt1 = jnp.sum(valid.astype(jnp.float32))
    hmask = jnp.logical_and(valid, diff > huber_c)
    sum2 = jnp.sum(jnp.where(hmask, diff * diff, 0.0))
    cnt2 = jnp.sum(hmask.astype(jnp.float32))
    return (sum1 + sum2) / (cnt1 + cnt2)


if __name__ == "__main__":
    key = jax.random.PRNGKey(0)
    k1, k2, k3 = jax.random.split(key, 3)

    N, C, H, W = 2, 4, 16, 16
    pred = jax.random.normal(k1, (N, C, H, W), dtype=jnp.float32)
    target = jax.random.normal(k2, (N, C, H, W), dtype=jnp.float32)
    valid_mask = jax.random.bernoulli(k3, p=0.7, shape=(N, 1, H, W))

    loss = jax.block_until_ready(berhu_loss(pred, target, valid_mask))
    ref = jax.block_until_ready(_berhu_loss_ref(pred, target, valid_mask))
    assert jnp.allclose(loss, ref, rtol=1e-5, atol=1e-5), (loss, ref)

    print("KERNEL_OK")
</pallas_src>

<mosaic_0001>
module attributes {stable_mosaic.version = 11 : i64} {
  func.func @_phase1_kernel(%arg0: i32, %arg1: i32, %arg2: memref<1x4x2x128xf32, #tpu.memory_space<vmem>>, %arg3: memref<1x4x2x128xf32, #tpu.memory_space<vmem>>, %arg4: memref<1x1x2x128xi8, #tpu.memory_space<vmem>>, %arg5: memref<1x2x128xf32, #tpu.memory_space<vmem>>, %arg6: memref<1x1x3xf32, #tpu.memory_space<smem>>) attributes {dimension_semantics = [#tpu.dimension_semantics<parallel>, #tpu.dimension_semantics<parallel>], iteration_bounds = array<i64: 2, 1>, scalar_prefetch = 0 : i64, scratch_operands = 0 : i64, tpu.core_type = #tpu.core_type<tc>, window_params = [{transform_indices = @transform_0, window_bounds = array<i64: 1, 4, 2, 128>}, {transform_indices = @transform_1, window_bounds = array<i64: 1, 4, 2, 128>}, {transform_indices = @transform_2, window_bounds = array<i64: 1, 1, 2, 128>}, {transform_indices = @transform_3, window_bounds = array<i64: 1, 2, 128>}, {transform_indices = @transform_4, window_bounds = array<i64: 1, 1, 3>}]} {
    %c0 = arith.constant 0 : index
    %c0_0 = arith.constant 0 : index
    %c0_1 = arith.constant 0 : index
    %c0_2 = arith.constant 0 : index
    %0 = vector.load %arg2[%c0, %c0_0, %c0_1, %c0_2] : memref<1x4x2x128xf32, #tpu.memory_space<vmem>>, vector<1x1x2x128xf32>
    %1 = vector.shape_cast %0 : vector<1x1x2x128xf32> to vector<2x128xf32>
    %c0_3 = arith.constant 0 : index
    %c0_4 = arith.constant 0 : index
    %c0_5 = arith.constant 0 : index
    %c0_6 = arith.constant 0 : index
    %2 = vector.load %arg3[%c0_3, %c0_4, %c0_5, %c0_6] : memref<1x4x2x128xf32, #tpu.memory_space<vmem>>, vector<1x1x2x128xf32>
    %3 = vector.shape_cast %2 : vector<1x1x2x128xf32> to vector<2x128xf32>
    %4 = arith.mulf %1, %1 : vector<2x128xf32>
    %5 = arith.mulf %3, %3 : vector<2x128xf32>
    %c0_7 = arith.constant 0 : index
    %c1 = arith.constant 1 : index
    %c0_8 = arith.constant 0 : index
    %c0_9 = arith.constant 0 : index
    %6 = vector.load %arg2[%c0_7, %c1, %c0_8, %c0_9] : memref<1x4x2x128xf32, #tpu.memory_space<vmem>>, vector<1x1x2x128xf32>
    %7 = vector.shape_cast %6 : vector<1x1x2x128xf32> to vector<2x128xf32>
    %c0_10 = arith.constant 0 : index
    %c1_11 = arith.constant 1 : index
    %c0_12 = arith.constant 0 : index
    %c0_13 = arith.constant 0 : index
    %8 = vector.load %arg3[%c0_10, %c1_11, %c0_12, %c0_13] : memref<1x4x2x128xf32, #tpu.memory_space<vmem>>, vector<1x1x2x128xf32>
    %9 = vector.shape_cast %8 : vector<1x1x2x128xf32> to vector<2x128xf32>
    %10 = arith.mulf %7, %7 : vector<2x128xf32>
    %11 = arith.addf %4, %10 : vector<2x128xf32>
    %12 = arith.mulf %9, %9 : vector<2x128xf32>
    %13 = arith.addf %5, %12 : vector<2x128xf32>
    %c0_14 = arith.constant 0 : index
    %c2 = arith.constant 2 : index
    %c0_15 = arith.constant 0 : index
    %c0_16 = arith.constant 0 : index
    %14 = vector.load %arg2[%c0_14, %c2, %c0_15, %c0_16] : memref<1x4x2x128xf32, #tpu.memory_space<vmem>>, vector<1x1x2x128xf32>
    %15 = vector.shape_cast %14 : vector<1x1x2x128xf32> to vector<2x128xf32>
    %c0_17 = arith.constant 0 : index
    %c2_18 = arith.constant 2 : index
    %c0_19 = arith.constant 0 : index
    %c0_20 = arith.constant 0 : index
    %16 = vector.load %arg3[%c0_17, %c2_18, %c0_19, %c0_20] : memref<1x4x2x128xf32, #tpu.memory_space<vmem>>, vector<1x1x2x128xf32>
    %17 = vector.shape_cast %16 : vector<1x1x2x128xf32> to vector<2x128xf32>
    %18 = arith.mulf %15, %15 : vector<2x128xf32>
    %19 = arith.addf %11, %18 : vector<2x128xf32>
    %20 = arith.mulf %17, %17 : vector<2x128xf32>
    %21 = arith.addf %13, %20 : vector<2x128xf32>
    %c0_21 = arith.constant 0 : index
    %c3 = arith.constant 3 : index
    %c0_22 = arith.constant 0 : index
    %c0_23 = arith.constant 0 : index
    %22 = vector.load %arg2[%c0_21, %c3, %c0_22, %c0_23] : memref<1x4x2x128xf32, #tpu.memory_space<vmem>>, vector<1x1x2x128xf32>
    %23 = vector.shape_cast %22 : vector<1x1x2x128xf32> to vector<2x128xf32>
    %c0_24 = arith.constant 0 : index
    %c3_25 = arith.constant 3 : index
    %c0_26 = arith.constant 0 : index
    %c0_27 = arith.constant 0 : index
    %24 = vector.load %arg3[%c0_24, %c3_25, %c0_26, %c0_27] : memref<1x4x2x128xf32, #tpu.memory_space<vmem>>, vector<1x1x2x128xf32>
    %25 = vector.shape_cast %24 : vector<1x1x2x128xf32> to vector<2x128xf32>
    %26 = arith.mulf %23, %23 : vector<2x128xf32>
    %27 = arith.addf %19, %26 : vector<2x128xf32>
    %28 = arith.mulf %25, %25 : vector<2x128xf32>
    %29 = arith.addf %21, %28 : vector<2x128xf32>
    %30 = math.sqrt %27 : vector<2x128xf32>
    %31 = math.sqrt %29 : vector<2x128xf32>
    %32 = arith.subf %30, %31 : vector<2x128xf32>
    %33 = math.absf %32 : vector<2x128xf32>
    %c0_28 = arith.constant 0 : index
    %c0_29 = arith.constant 0 : index
    %c0_30 = arith.constant 0 : index
    %c0_31 = arith.constant 0 : index
    %34 = vector.load %arg4[%c0_28, %c0_29, %c0_30, %c0_31] : memref<1x1x2x128xi8, #tpu.memory_space<vmem>>, vector<1x1x2x128xi8>
    %35 = vector.shape_cast %34 : vector<1x1x2x128xi8> to vector<2x128xi8>
    %c0_i8 = arith.constant 0 : i8
    %36 = vector.broadcast %c0_i8 : i8 to vector<2x128xi8>
    %37 = arith.cmpi ne, %35, %36 : vector<2x128xi8>
    %cst = arith.constant -3.000000e+38 : f32
    %38 = vector.broadcast %cst : f32 to vector<2x128xf32>
    %39 = arith.select %37, %33, %38 : vector<2x128xi1>, vector<2x128xf32>
    %c0_32 = arith.constant 0 : index
    %c0_33 = arith.constant 0 : index
    %c0_34 = arith.constant 0 : index
    %40 = vector.load %arg5[%c0_32, %c0_33, %c0_34] : memref<1x2x128xf32, #tpu.memory_space<vmem>>, vector<1x2x128xf32>
    %41 = vector.shape_cast %40 : vector<1x2x128xf32> to vector<2x128xf32>
    %42 = vector.shape_cast %39 : vector<2x128xf32> to vector<1x2x128xf32>
    tpu.vector_store %arg5[%c0_32, %c0_33, %c0_34], %42 {strides = array<i32>} : memref<1x2x128xf32, #tpu.memory_space<vmem>>, vector<1x2x128xf32>,
    %cst_35 = arith.constant 0.000000e+00 : f32
    %43 = vector.broadcast %cst_35 : f32 to vector<2x128xf32>
    %44 = arith.select %37, %33, %43 : vector<2x128xi1>, vector<2x128xf32>
    %45 = vector.shape_cast %44 : vector<2x128xf32> to vector<1x2x128xf32>
    %cst_36 = arith.constant dense<0.000000e+00> : vector<1xf32>
    %46 = vector.multi_reduction <add>, %45, %cst_36 [1, 2] : vector<1x2x128xf32> to vector<1xf32>
    %47 = vector.shape_cast %46 : vector<1xf32> to vector<1x1x1xf32>
    %48 = vector.extract %47[0, 0, 0] : f32 from vector<1x1x1xf32>
    %c0_37 = arith.constant 0 : index
    %c0_38 = arith.constant 0 : index
    %c0_39 = arith.constant 0 : index
    %49 = memref.load %arg6[%c0_37, %c0_38, %c0_39] : memref<1x1x3xf32, #tpu.memory_space<smem>>
    memref.store %48, %arg6[%c0_37, %c0_38, %c0_39] : memref<1x1x3xf32, #tpu.memory_space<smem>>
    %50 = arith.extui %37 : vector<2x128xi1> to vector<2x128xi32>
    %51 = arith.sitofp %50 : vector<2x128xi32> to vector<2x128xf32>
    %52 = vector.shape_cast %51 : vector<2x128xf32> to vector<1x2x128xf32>
    %cst_40 = arith.constant dense<0.000000e+00> : vector<1xf32>
    %53 = vector.multi_reduction <add>, %52, %cst_40 [1, 2] : vector<1x2x128xf32> to vector<1xf32>
    %54 = vector.shape_cast %53 : vector<1xf32> to vector<1x1x1xf32>
    %55 = vector.extract %54[0, 0, 0] : f32 from vector<1x1x1xf32>
    %c0_41 = arith.constant 0 : index
    %c0_42 = arith.constant 0 : index
    %c1_43 = arith.constant 1 : index
    %56 = memref.load %arg6[%c0_41, %c0_42, %c1_43] : memref<1x1x3xf32, #tpu.memory_space<smem>>
    memref.store %55, %arg6[%c0_41, %c0_42, %c1_43] : memref<1x1x3xf32, #tpu.memory_space<smem>>
    %57 = vector.shape_cast %32 : vector<2x128xf32> to vector<1x2x128xf32>
    %cst_44 = arith.constant dense<0xFF800000> : vector<1xf32>
    %58 = vector.multi_reduction <maximumf>, %57, %cst_44 [1, 2] : vector<1x2x128xf32> to vector<1xf32>
    %59 = vector.shape_cast %58 : vector<1xf32> to vector<1x1x1xf32>
    %60 = vector.extract %59[0, 0, 0] : f32 from vector<1x1x1xf32>
    %c0_45 = arith.constant 0 : index
    %c0_46 = arith.constant 0 : index
    %c2_47 = arith.constant 2 : index
    %61 = memref.load %arg6[%c0_45, %c0_46, %c2_47] : memref<1x1x3xf32, #tpu.memory_space<smem>>
    memref.store %60, %arg6[%c0_45, %c0_46, %c2_47] : memref<1x1x3xf32, #tpu.memory_space<smem>>
    return
  }
  func.func @transform_0(%arg0: i32, %arg1: i32) -> (i32, i32, i32, i32) {
    %c0_i32 = arith.constant 0 : i32
    %c0_i32_0 = arith.constant 0 : i32
    %c0_i32_1 = arith.constant 0 : i32
    return %arg0, %c0_i32, %arg1, %c0_i32_0 : i32, i32, i32, i32
  }
  func.func @transform_1(%arg0: i32, %arg1: i32) -> (i32, i32, i32, i32) {
    %c0_i32 = arith.constant 0 : i32
    %c0_i32_0 = arith.constant 0 : i32
    %c0_i32_1 = arith.constant 0 : i32
    return %arg0, %c0_i32, %arg1, %c0_i32_0 : i32, i32, i32, i32
  }
  func.func @transform_2(%arg0: i32, %arg1: i32) -> (i32, i32, i32, i32) {
    %c0_i32 = arith.constant 0 : i32
    %c0_i32_0 = arith.constant 0 : i32
    %c0_i32_1 = arith.constant 0 : i32
    return %arg0, %c0_i32, %arg1, %c0_i32_0 : i32, i32, i32, i32
  }
  func.func @transform_3(%arg0: i32, %arg1: i32) -> (i32, i32, i32) {
    %c0_i32 = arith.constant 0 : i32
    %c0_i32_0 = arith.constant 0 : i32
    return %arg0, %arg1, %c0_i32 : i32, i32, i32
  }
  func.func @transform_4(%arg0: i32, %arg1: i32) -> (i32, i32, i32) {
    %c0_i32 = arith.constant 0 : i32
    %c0_i32_0 = arith.constant 0 : i32
    return %arg0, %arg1, %c0_i32 : i32, i32, i32
  }
}

</mosaic_0001>

<llo_original>
// kernel: tpu_custom_call.1
$region0: #{tpu_custom_call.1}
  #allocation0 [shape = 'u32[]', space=smem, size = 0x4, offset = 0x4, fixed_abs, tag = 'smem constant byte address 0x4 - core index']
  #allocation1 [shape = 'u32[144,128]{1,0:T(1,128)}', space=vmem, size = 0x12000, scoped, tag = 'internal scratch']
  %s0 = inlined_call_operand.hbm [shape: f32[2,4,2,128], index: 0, kind: input, shape index: {}]
  %s1 = inlined_call_operand.hbm [shape: f32[2,4,2,128], index: 1, kind: input, shape index: {}]
  %s2 = inlined_call_operand.vmem [shape: s8[2,1,2,128], index: 2, kind: input, shape index: {}]
  %s3 = inlined_call_operand.hbm [shape: f32[2,2,128], index: 3, kind: output, shape index: {0}]
  %s4 = inlined_call_operand.hbm [shape: f32[2,1,3], index: 4, kind: output, shape index: {1}]
  %5 = xla_tuple %s3, %s4
  %s6 = sld [smem:[#allocation0]]
  $region61: #{tpu_custom_call.1} parent=0
    _
  %s8 = ssub.s32 1, %s6
  %s9 = scalar_select 0, %s8, %s6
  $region1: #{tpu_custom_call.1} parent=0
    #allocation2 [shape = 'u8[8192]{0}', space=vmem, size = 0x2000, scoped, tag = 'input window, operand 0']
    #allocation3 [shape = 's32[2]{0}', space=sflag, size = 0x8, scoped, tag = 'scoped memory for tpu_custom_call.1']
    #allocation4 [shape = 's32[2]{0}', space=sflag, size = 0x8, scoped, tag = 'scoped memory for tpu_custom_call.1']
    #allocation5 [shape = 's32[2]{0}', space=sflag, size = 0x8, scoped, tag = 'scoped memory for tpu_custom_call.1']
    #allocation6 [shape = 'u8[8192]{0}', space=vmem, size = 0x2000, scoped, tag = 'input window, operand 1']
    #allocation7 [shape = 's32[2]{0}', space=sflag, size = 0x8, scoped, tag = 'scoped memory for tpu_custom_call.1']
    #allocation8 [shape = 'u8[2048]{0}', space=vmem, size = 0x800, scoped, tag = 'output window, operand 0']
    #allocation9 [shape = 'u8[1024]{0}', space=smem, size = 0x400, scoped, tag = 'output window, operand 1']
    %10 = vsyncpa [#allocation3], 0
    %s11 = scalar_lea.sflag [#allocation3], 1
    %12 = vsyncpa %s11, 0
    %13 = vsyncpa [#allocation7], 0
    %s14 = scalar_lea.sflag [#allocation7], 1
    %15 = vsyncpa %s14, 0
    %16 = vsyncpa [#allocation4], 0
    %s17 = scalar_lea.sflag [#allocation4], 1
    %18 = vsyncpa %s17, 0
    %19 = vsyncpa [#allocation5], 0
    %s20 = scalar_lea.sflag [#allocation5], 1
    %21 = vsyncpa %s20, 0
    loop: start=0, step=1, limit=4
    $region2: #{tpu_custom_call.1} parent=1 // loop_pre_header
      _
    $region3: #{tpu_custom_call.1} parent=1 // loop_header
      %s23 = sphi 0, %s27
      %p24 = scmp.ge.s32.totalorder %s23, 4
      %s30 = sphi 0, %s42
      %s31 = sphi 0, %s38
      %s32 = sphi 0, %s30
      %s33 = sphi 0, %s31
      %s34 = sphi 0, %s32
      %s35 = sphi 0, %s33
      %s47 = sphi 0, %s49
      %s50 = sphi 0, %s47
      %s51 = sphi 0, %s50
      %s67 = sphi 0, %s51
      %s75 = sphi 0, %s77
      %s78 = sphi 0, %s75
      %s79 = sphi 0, %s78
      %s95 = sphi 0, %s79
      %s103 = sphi 0, %s105
      %s106 = sphi 0, %s103
      %s107 = sphi 0, %s106
      %s123 = sphi 0, %s107
      %s131 = sphi 0, %s133
      %s134 = sphi 0, %s131
      %s135 = sphi 0, %s134
      %s151 = sphi 0, %s135
      %s159 = sphi 0, %s161
      %s162 = sphi 0, %s159
      %s163 = sphi 0, %s162
      %s179 = sphi 0, %s163
    $region4: #{tpu_custom_call.1} parent=1 // loop_header_branch
      %26 = sbr.rel (%p24) target = $region8
    $region5: #{tpu_custom_call.1} parent=1 // loop_body
      %s28 = ssub.s32 %s23, 1
      %s29 = ssub.s32 %s23, 2
      %s36 = sadd.s32 1, %s31
      %p37 = scmp.ge.s32.totalorder %s36, 1
      %s38 = scalar_select %p37, 0, %s36
      %s39 = sadd.s32 1, %s30
      %s40 = scalar_select %p37, %s39, %s30
      %p41 = scmp.ge.s32.totalorder %s40, 2
      %s42 = scalar_select %p41, 0, %s40
      %s43 = ssub.s32 %s30, %s42
      %s44 = ssub.s32 %s31, %s38
      %s45 = sor.u32 %s43, %s44
      %p46 = scmp.eq.s32.totalorder %s45, 0
      %s48 = sadd.s32 %s47, 1
      %s49 = scalar_select %p46, %s47, %s48
      %p52 = pneg %p46
      %p53 = scmp.eq.s32.totalorder %s23, 1
      %p54 = por %p52, %p53
      %p55 = scmp.ne.s32.totalorder %s47, %s50
      %p56 = scmp.eq.s32.totalorder %s23, 0
      %p57 = por %p55, %p56
      %p58 = scmp.ne.s32.totalorder %s47, %s50
      %p59 = scmp.eq.s32.totalorder %s28, 1
      %p60 = por %p58, %p59
      %p61 = scmp.ne.s32.totalorder %s50, %s51
      %p62 = scmp.eq.s32.totalorder %s28, 0
      %p63 = por %p61, %p62
      %p64 = scmp.ne.s32.totalorder %s50, %s51
      %p65 = scmp.eq.s32.totalorder %s29, 1
      %p66 = por %p64, %p65
      %p68 = scmp.ne.s32.totalorder %s51, %s67
      %p69 = scmp.eq.s32.totalorder %s29, 0
      %p70 = por %p68, %p69
      %s71 = ssub.s32 %s30, %s42
      %s72 = ssub.s32 %s31, %s38
      %s73 = sor.u32 %s71, %s72
      %p74 = scmp.eq.s32.totalorder %s73, 0
      %s76 = sadd.s32 %s75, 1
      %s77 = scalar_select %p74, %s75, %s76
      %p80 = pneg %p74
      %p81 = scmp.eq.s32.totalorder %s23, 1
      %p82 = por %p80, %p81
      %p83 = scmp.ne.s32.totalorder %s75, %s78
      %p84 = scmp.eq.s32.totalorder %s23, 0
      %p85 = por %p83, %p84
      %p86 = scmp.ne.s32.totalorder %s75, %s78
      %p87 = scmp.eq.s32.totalorder %s28, 1
      %p88 = por %p86, %p87
      %p89 = scmp.ne.s32.totalorder %s78, %s79
      %p90 = scmp.eq.s32.totalorder %s28, 0
      %p91 = por %p89, %p90
      %p92 = scmp.ne.s32.totalorder %s78, %s79
      %p93 = scmp.eq.s32.totalorder %s29, 1
      %p94 = por %p92, %p93
      %p96 = scmp.ne.s32.totalorder %s79, %s95
      %p97 = scmp.eq.s32.totalorder %s29, 0
      %p98 = por %p96, %p97
      %s99 = ssub.s32 %s30, %s42
      %s100 = ssub.s32 %s31, %s38
      %s101 = sor.u32 %s99, %s100
      %p102 = scmp.eq.s32.totalorder %s101, 0
      %s104 = sadd.s32 %s103, 1
      %s105 = scalar_select %p102, %s103, %s104
      %p108 = pneg %p102
      %p109 = scmp.eq.s32.totalorder %s23, 1
      %p110 = por %p108, %p109
      %p111 = scmp.ne.s32.totalorder %s103, %s106
      %p112 = scmp.eq.s32.totalorder %s23, 0
      %p113 = por %p111, %p112
      %p114 = scmp.ne.s32.totalorder %s103, %s106
      %p115 = scmp.eq.s32.totalorder %s28, 1
      %p116 = por %p114, %p115
      %p117 = scmp.ne.s32.totalorder %s106, %s107
      %p118 = scmp.eq.s32.totalorder %s28, 0
      %p119 = por %p117, %p118
      %p120 = scmp.ne.s32.totalorder %s106, %s107
      %p121 = scmp.eq.s32.totalorder %s29, 1
      %p122 = por %p120, %p121
      %p124 = scmp.ne.s32.totalorder %s107, %s123
      %p125 = scmp.eq.s32.totalorder %s29, 0
      %p126 = por %p124, %p125
      %s127 = ssub.s32 %s30, %s42
      %s128 = ssub.s32 %s31, %s38
      %s129 = sor.u32 %s127, %s128
      %p130 = scmp.eq.s32.totalorder %s129, 0
      %s132 = sadd.s32 %s131, 1
      %s133 = scalar_select %p130, %s131, %s132
      %p136 = pneg %p130
      %p137 = scmp.eq.s32.totalorder %s23, 1
      %p138 = por %p136, %p137
      %p139 = scmp.ne.s32.totalorder %s131, %s134
      %p140 = scmp.eq.s32.totalorder %s23, 0
      %p141 = por %p139, %p140
      %p142 = scmp.ne.s32.totalorder %s131, %s134
      %p143 = scmp.eq.s32.totalorder %s28, 1
      %p144 = por %p142, %p143
      %p145 = scmp.ne.s32.totalorder %s134, %s135
      %p146 = scmp.eq.s32.totalorder %s28, 0
      %p147 = por %p145, %p146
      %p148 = scmp.ne.s32.totalorder %s134, %s135
      %p149 = scmp.eq.s32.totalorder %s29, 1
      %p150 = por %p148, %p149
      %p152 = scmp.ne.s32.totalorder %s135, %s151
      %p153 = scmp.eq.s32.totalorder %s29, 0
      %p154 = por %p152, %p153
      %s155 = ssub.s32 %s30, %s42
      %s156 = ssub.s32 %s31, %s38
      %s157 = sor.u32 %s155, %s156
      %p158 = scmp.eq.s32.totalorder %s157, 0
      %s160 = sadd.s32 %s159, 1
      %s161 = scalar_select %p158, %s159, %s160
      %p164 = pneg %p158
      %p165 = scmp.eq.s32.totalorder %s23, 1
      %p166 = por %p164, %p165
      %p167 = scmp.ne.s32.totalorder %s159, %s162
      %p168 = scmp.eq.s32.totalorder %s23, 0
      %p169 = por %p167, %p168
      %p170 = scmp.ne.s32.totalorder %s159, %s162
      %p171 = scmp.eq.s32.totalorder %s28, 1
      %p172 = por %p170, %p171
      %p173 = scmp.ne.s32.totalorder %s162, %s163
      %p174 = scmp.eq.s32.totalorder %s28, 0
      %p175 = por %p173, %p174
      %p176 = scmp.ne.s32.totalorder %s162, %s163
      %p177 = scmp.eq.s32.totalorder %s29, 1
      %p178 = por %p176, %p177
      %p180 = scmp.ne.s32.totalorder %s163, %s179
      %p181 = scmp.eq.s32.totalorder %s29, 0
      %p182 = por %p180, %p181
      %p183 = scmp.le.s32.totalorder 1, %s23
      %p184 = scmp.lt.s32.totalorder %s23, 3
      %p185 = pnand %p183, %p184
      %p186 = pneg %p185
      // Predicated region
      $region9: #{tpu_custom_call.1} parent=5 // pred_check
        _
      $region10: #{tpu_custom_call.1} parent=5 // pred_check_branch
        %188 = sbr.rel (%p185) target = $region12
      $region11: #{tpu_custom_call.1} parent=5 // pred_region
        %s189 = ssub.s32 %s23, 1
      $region12: #{tpu_custom_call.1} parent=5 // pred_fallthru
        _
      %p190 = scmp.lt.s32.totalorder %s23, 2
      // Predicated region
      $region13: #{tpu_custom_call.1} parent=5 // pred_check
        %p191 = pneg %p190
      $region14: #{tpu_custom_call.1} parent=5 // pred_check_branch
        %193 = sbr.rel (%p191) target = $region16
      $region15: #{tpu_custom_call.1} parent=5 // pred_region
        // Predicated region
        $region17: #{tpu_custom_call.1} parent=15 // pred_check
          %p194 = pneg %p57
        $region18: #{tpu_custom_call.1} parent=15 // pred_check_branch
          %196 = sbr.rel (%p194) target = $region20
        $region19: #{tpu_custom_call.1} parent=15 // pred_region
          %s197 = sand.u32 %s47, 1
          %s198 = scalar_lea.sflag [#allocation3], %s197
          %s199 = sand.u32 %s47, 1
          %s200 = smul.addr %s199, 8
          %s201 = scalar_lea.vmem [#allocation2], %s200
          %s203 = ssub.s32 128, 128
          %204 = vsyncadd %s198, %s203
          %s205 = smul.addr %s30, 4
          %s206 = sadd.s32 %s31, %s205
          %s207 = smul.addr %s206, 32
          %s208 = scalar_lea.hbm %s0, %s207
          %s209 = sshll.u32 %s201, 4
          %s210 = int_to_ptr.vmem [resolvable:$true] %s209
          %215 = dma.hbm_to_vmem [thread:$0]  %s208, 128, %s210, %s198, 32, 32, 2
        $region20: #{tpu_custom_call.1} parent=15 // pred_fallthru
          _
        // Predicated region
        $region21: #{tpu_custom_call.1} parent=15 // pred_check
          %p216 = pneg %p85
        $region22: #{tpu_custom_call.1} parent=15 // pred_check_branch
          %218 = sbr.rel (%p216) target = $region24
        $region23: #{tpu_custom_call.1} parent=15 // pred_region
          %s219 = sand.u32 %s75, 1
          %s220 = scalar_lea.sflag [#allocation7], %s219
          %s221 = sand.u32 %s75, 1
          %s222 = smul.addr %s221, 8
          %s223 = scalar_lea.vmem [#allocation6], %s222
          %s225 = ssub.s32 128, 128
          %226 = vsyncadd %s220, %s225
          %s227 = smul.addr %s30, 4
          %s228 = sadd.s32 %s31, %s227
          %s229 = smul.addr %s228, 32
          %s230 = scalar_lea.hbm %s1, %s229
          %s231 = sshll.u32 %s223, 4
          %s232 = int_to_ptr.vmem [resolvable:$true] %s231
          %237 = dma.hbm_to_vmem [thread:$0]  %s230, 128, %s232, %s220, 32, 32, 2
        $region24: #{tpu_custom_call.1} parent=15 // pred_fallthru
          _
        // Predicated region
        $region25: #{tpu_custom_call.1} parent=15 // pred_check
          %p238 = pneg %p113
        $region26: #{tpu_custom_call.1} parent=15 // pred_check_branch
          %240 = sbr.rel (%p238) target = $region28
        $region27: #{tpu_custom_call.1} parent=15 // pred_region
          %p241 = scmp.lt.s32.totalorder %s30, 1
          %s242 = scalar_select %p241, %s30, 1
          %p243 = scmp.lt.s32.totalorder %s31, 0
          %s244 = scalar_select %p243, %s31, 0
          %s245 = sadd.s32 %s244, %s242
          %s246 = scalar_lea.vmem %s2, %s245
        $region28: #{tpu_custom_call.1} parent=15 // pred_fallthru
          _
      $region16: #{tpu_custom_call.1} parent=5 // pred_fallthru
        _
      %p247 = scmp.le.s32.totalorder 1, %s23
      %p248 = scmp.lt.s32.totalorder %s23, 3
      %p249 = pnand %p247, %p248
      %p250 = pneg %p249
      // Predicated region
      $region29: #{tpu_custom_call.1} parent=5 // pred_check
        _
      $region30: #{tpu_custom_call.1} parent=5 // pred_check_branch
        %252 = sbr.rel (%p249) target = $region32
      $region31: #{tpu_custom_call.1} parent=5 // pred_region
        %s253 = ssub.s32 %s23, 1
        %s254 = sand.u32 %s50, 1
        %s255 = scalar_lea.sflag [#allocation3], %s254
        %s256 = sand.u32 %s50, 1
        %s257 = smul.addr %s256, 8
        %s258 = scalar_lea.vmem [#allocation2], %s257
        // Predicated region
        $region33: #{tpu_custom_call.1} parent=31 // pred_check
          %p259 = pneg %p63
        $region34: #{tpu_custom_call.1} parent=31 // pred_check_branch
          %261 = sbr.rel (%p259) target = $region36
        $region35: #{tpu_custom_call.1} parent=31 // pred_region
          %262 = dma.done %s255, 128
        $region36: #{tpu_custom_call.1} parent=31 // pred_fallthru
          _
        %s263 = sand.u32 %s78, 1
        %s264 = scalar_lea.sflag [#allocation7], %s263
        %s265 = sand.u32 %s78, 1
        %s266 = smul.addr %s265, 8
        %s267 = scalar_lea.vmem [#allocation6], %s266
        // Predicated region
        $region37: #{tpu_custom_call.1} parent=31 // pred_check
          %p268 = pneg %p91
        $region38: #{tpu_custom_call.1} parent=31 // pred_check_branch
          %270 = sbr.rel (%p268) target = $region40
        $region39: #{tpu_custom_call.1} parent=31 // pred_region
          %271 = dma.done %s264, 128
        $region40: #{tpu_custom_call.1} parent=31 // pred_fallthru
          _
        %s272 = sand.u32 %s50, 1
        %s273 = scalar_lea.sflag [#allocation3], %s272
        %s274 = sand.u32 %s50, 1
        %s275 = smul.addr %s274, 8
        %s276 = scalar_lea.vmem [#allocation2], %s275
        %p277 = pneg %p63
        %p278 = pneg %p60
        %s279 = sand.u32 %s78, 1
        %s280 = scalar_lea.sflag [#allocation7], %s279
        %s281 = sand.u32 %s78, 1
        %s282 = smul.addr %s281, 8
        %s283 = scalar_lea.vmem [#allocation6], %s282
        %p284 = pneg %p91
        %p285 = pneg %p88
        %p286 = scmp.lt.s32.totalorder %s32, 1
        %s287 = scalar_select %p286, %s32, 1
        %p288 = scmp.lt.s32.totalorder %s33, 0
        %s289 = scalar_select %p288, %s33, 0
        %s290 = sadd.s32 %s289, %s287
        %s291 = scalar_lea.vmem %s2, %s290
        %p292 = pneg %p119
        %p293 = pneg %p116
        %p294 = pneg %p147
        %p295 = pneg %p144
        %s296 = sand.u32 %s134, 1
        %s297 = scalar_lea.sflag [#allocation4], %s296
        %s298 = sand.u32 %s134, 1
        %s299 = smul.addr %s298, 2
        %s300 = scalar_lea.vmem [#allocation8], %s299
        %p301 = pneg %p175
        %p302 = pneg %p172
        %s303 = sand.u32 %s162, 1
        %s304 = scalar_lea.sflag [#allocation5], %s303
        %s305 = sand.u32 %s162, 1
        %s306 = smul.addr %s305, 128
        %s307 = scalar_lea.smem [#allocation9], %s306
        %p308 = scmp.lt.s32.totalorder %s32, 1
        %s309 = scalar_select %p308, %s32, 1
        %p310 = scmp.lt.s32.totalorder %s33, 0
        %s311 = scalar_select %p310, %s33, 0
        %s312 = sadd.s32 %s311, %s309
        %s313 = scalar_lea.vmem %s2, %s312
        %v316 = vld [vmem:[%s258] sm:$0x3]
        %v317 = vld [vmem:[%s267] sm:$0x3]
        %v318 = vmul.f32 %v316, %v316
        %v319 = vmul.f32 %v317, %v317
        %s320 = scalar_lea.vmem %s258, 2 [#allocation2]
        %v321 = vld [vmem:[%s320] sm:$0x3]
        %s322 = scalar_lea.vmem %s267, 2 [#allocation6]
        %v323 = vld [vmem:[%s322] sm:$0x3]
        %v324 = vmul.f32 %v321, %v321
        %v325 = vadd.f32 %v318, %v324
        %v326 = vmul.f32 %v323, %v323
        %v327 = vadd.f32 %v319, %v326
        %s328 = scalar_lea.vmem %s258, 4 [#allocation2]
        %v329 = vld [vmem:[%s328] sm:$0x3]
        %s330 = scalar_lea.vmem %s267, 4 [#allocation6]
        %v331 = vld [vmem:[%s330] sm:$0x3]
        %v332 = vmul.f32 %v329, %v329
        %v333 = vadd.f32 %v325, %v332
        %v334 = vmul.f32 %v331, %v331
        %v335 = vadd.f32 %v327, %v334
        %s336 = scalar_lea.vmem %s258, 6 [#allocation2]
        %v337 = vld [vmem:[%s336] sm:$0x3]
        %s338 = scalar_lea.vmem %s267, 6 [#allocation6]
        %v339 = vld [vmem:[%s338] sm:$0x3]
        %v340 = vmul.f32 %v337, %v337
        %v341 = vadd.f32 %v333, %v340
        %v342 = vmul.f32 %v339, %v339
        %v343 = vadd.f32 %v335, %v342
        %v344 = vrsqrt.pop %v341
        %v345 = vmul.f32 %v341, %v344
        %vm346 = vcmp.eq.f32.partialorder %v341, inf
        %v347 = vsel %vm346, %v341, %v345
        %vm348 = vcmp.eq.f32.partialorder %v341, 0.0
        %v349 = vand.u32 %v341, 2147483648
        %v350 = vsel %vm348, %v349, %v347
        %v351 = vrsqrt.pop %v343
        %v352 = vmul.f32 %v343, %v351
        %vm353 = vcmp.eq.f32.partialorder %v343, inf
        %v354 = vsel %vm353, %v343, %v352
        %vm355 = vcmp.eq.f32.partialorder %v343, 0.0
        %v356 = vand.u32 %v343, 2147483648
        %v357 = vsel %vm355, %v356, %v354
        %v358 = vsub.f32 %v350, %v357
        %v359 = vand.u32 2147483647, %v358
        %v360 = vld [vmem:[%s313] sm:$0x1]
        %vm361 = vnez %v360
        %v362 = vsel %vm361, 16843009, 0
        %v363 = vunpack.c.0.s8 %v362
        %vm364 = vcmp.ne.s32.totalorder %v363, 0
        %v365 = vsel %vm364, %v359, -3e+38
        %366 = vst [vmem:[%s300] sm:$0x3] %v365
        %v367 = vsel %vm364, %v359, 0.0
        %vm368 = vcmask 1041408
        %v369 = vsel %vm368, %v367, 0.0
        %370 = vadd.xlane.f32.xlu0 %v369
        %v371 = vpop.xlane.xlu0 %370
        %v372 = vrot.slane %v371, 4
        %v373 = vadd.f32 %v371, %v372
        %v374 = vrot.slane %v373, 2
        %v375 = vadd.f32 %v373, %v374
        %v376 = vrot.slane %v375, 1
        %v377 = vadd.f32 %v375, %v376
        %s378 = vtos %v377
        %s379 = scalar_lea.smem %s307, 0 [#allocation9]
        %380 = sst [smem:[%s379]] %s378
        %v381 = vsel %vm364, 1, 0
        %v382 = vcvt.s32.f32 %v381
        %v383 = vsel %vm368, %v382, 0.0
        %384 = vadd.xlane.f32.xlu0 %v383
        %v385 = vpop.xlane.xlu0 %384
        %v386 = vrot.slane %v385, 4
        %v387 = vadd.f32 %v385, %v386
        %v388 = vrot.slane %v387, 2
        %v389 = vadd.f32 %v387, %v388
        %v390 = vrot.slane %v389, 1
        %v391 = vadd.f32 %v389, %v390
        %s392 = vtos %v391
        %s393 = scalar_lea.smem %s307, 1 [#allocation9]
        %394 = sst [smem:[%s393]] %s392
        %v395 = vsel %vm368, %v358, -inf
        %396 = vmax.xlane.f32.xlu0 %v395
        %v397 = vpop.xlane.xlu0 %396
        %v398 = vrot.slane %v397, 4
        %v399 = vmax.f32 %v397, %v398
        %v400 = vrot.slane %v399, 2
        %v401 = vmax.f32 %v399, %v400
        %v402 = vrot.slane %v401, 1
        %v403 = vmax.f32 %v401, %v402
        %s404 = vtos %v403
        %s405 = scalar_lea.smem %s307, 2 [#allocation9]
        %406 = sst [smem:[%s405]] %s404
        %s407 = sand.u32 %s134, 1
        %s408 = scalar_lea.sflag [#allocation4], %s407
        %s409 = sand.u32 %s134, 1
        %s410 = smul.addr %s409, 2
        %s411 = scalar_lea.vmem [#allocation8], %s410
        %s412 = sand.u32 %s162, 1
        %s413 = scalar_lea.sflag [#allocation5], %s412
        %s414 = sand.u32 %s162, 1
        %s415 = smul.addr %s414, 128
        %s416 = scalar_lea.smem [#allocation9], %s415
        // Predicated region
        $region41: #{tpu_custom_call.1} parent=31 // pred_check
          %p417 = pneg %p144
        $region42: #{tpu_custom_call.1} parent=31 // pred_check_branch
          %419 = sbr.rel (%p417) target = $region44
        $region43: #{tpu_custom_call.1} parent=31 // pred_region
          %s421 = ssub.s32 32, 32
          %422 = vsyncadd %s408, %s421
          %s423 = sadd.s32 %s33, %s32
          %s424 = smul.addr %s423, 32
          %s425 = scalar_lea.hbm %s3, %s424
          %s427 = sshll.u32 %s411, 4
          %s428 = int_to_ptr.vmem [resolvable:$true] %s427
          %430 = dma.vmem_to_hbm [thread:$0]  %s428, 32, %s425, %s408
        $region44: #{tpu_custom_call.1} parent=31 // pred_fallthru
          _
        // Predicated region
        $region45: #{tpu_custom_call.1} parent=31 // pred_check
          %p431 = pneg %p172
        $region46: #{tpu_custom_call.1} parent=31 // pred_check_branch
          %433 = sbr.rel (%p431) target = $region48
        $region47: #{tpu_custom_call.1} parent=31 // pred_region
          %s435 = ssub.s32 16, 16
          %436 = vsyncadd %s413, %s435
          %s437 = sadd.s32 %s33, %s32
          %s438 = smul.addr %s437, 16
          %s439 = scalar_lea.hbm %s4, %s438
          %442 = dma.smem_to_hbm %s416, 16, %s439, %s413
        $region48: #{tpu_custom_call.1} parent=31 // pred_fallthru
          _
      $region32: #{tpu_custom_call.1} parent=5 // pred_fallthru
        _
      %p443 = scmp.le.s32.totalorder 2, %s23
      // Predicated region
      $region49: #{tpu_custom_call.1} parent=5 // pred_check
        %p444 = pneg %p443
      $region50: #{tpu_custom_call.1} parent=5 // pred_check_branch
        %446 = sbr.rel (%p444) target = $region52
      $region51: #{tpu_custom_call.1} parent=5 // pred_region
        %s447 = ssub.s32 %s23, 2
        // Predicated region
        $region53: #{tpu_custom_call.1} parent=51 // pred_check
          %p448 = pneg %p150
        $region54: #{tpu_custom_call.1} parent=51 // pred_check_branch
          %450 = sbr.rel (%p448) target = $region56
        $region55: #{tpu_custom_call.1} parent=51 // pred_region
          %s451 = sand.u32 %s135, 1
          %s452 = scalar_lea.sflag [#allocation4], %s451
          %s453 = sand.u32 %s135, 1
          %s454 = smul.addr %s453, 2
          %s455 = scalar_lea.vmem [#allocation8], %s454
          %456 = dma.done %s452, 32
        $region56: #{tpu_custom_call.1} parent=51 // pred_fallthru
          _
        // Predicated region
        $region57: #{tpu_custom_call.1} parent=51 // pred_check
          %p457 = pneg %p178
        $region58: #{tpu_custom_call.1} parent=51 // pred_check_branch
          %459 = sbr.rel (%p457) target = $region60
        $region59: #{tpu_custom_call.1} parent=51 // pred_region
          %s460 = sand.u32 %s163, 1
          %s461 = scalar_lea.sflag [#allocation5], %s460
          %s462 = sand.u32 %s163, 1
          %s463 = smul.addr %s462, 128
          %s464 = scalar_lea.smem [#allocation9], %s463
          %465 = dma.done %s461, 16
        $region60: #{tpu_custom_call.1} parent=51 // pred_fallthru
          _
        %466 = sfence
      $region52: #{tpu_custom_call.1} parent=5 // pred_fallthru
        _
    $region6: #{tpu_custom_call.1} parent=1 // loop_footer
      %s27 = sadd.s32 1, %s23
    $region7: #{tpu_custom_call.1} parent=1 // loop_footer_branch
      %22 = sbr.rel target = $region3
    $region8: #{tpu_custom_call.1} parent=1 // loop_exit
      _
    %467 = vsyncpa [#allocation3], 1
    %s468 = scalar_lea.sflag [#allocation3], 1
    %469 = vsyncpa %s468, 1
    %470 = vsyncpa [#allocation7], 1
    %s471 = scalar_lea.sflag [#allocation7], 1
    %472 = vsyncpa %s471, 1
    %473 = vsyncpa [#allocation4], 1
    %s474 = scalar_lea.sflag [#allocation4], 1
    %475 = vsyncpa %s474, 1
    %476 = vsyncpa [#allocation5], 1
    %s477 = scalar_lea.sflag [#allocation5], 1
    %478 = vsyncpa %s477, 1

</llo_original>
